<compile_context>
chip_gen: v7x
topology: tpu7x:2x2x1
jax: 0.10.0
libtpu: 0.0.40
codegen_flags: <defaults>
</compile_context>

<pallas_src>
import jax
import jax.numpy as jnp
from jax.experimental import pallas as pl
from jax.experimental.pallas import tpu as pltpu

_LANE = 128


def _round_up(x, m):
    return ((x + m - 1) // m) * m


def _leaky_relu(x, slope=0.2):
    return jnp.where(x > 0, x, slope * x)


def make_discriminator_kernel(n_layers):
    """Kernel computing the full MLP chain for n_layers Linear layers on one batch tile."""

    def kernel(x_ref, *refs):
        # refs = (w0, b0, w1, b1, ..., w_{L-1}, b_{L-1}, out_ref)
        out_ref = refs[-1]
        params = refs[:-1]
        h = x_ref[...]                              # bf16 (TM, input_size)
        for li in range(n_layers):
            w = params[2 * li][...]                 # bf16, VMEM-resident (pre-cast in wrapper)
            b = params[2 * li + 1][...]             # f32 (1, out)
            h = jnp.dot(h, w, preferred_element_type=jnp.float32) + b
            if li < n_layers - 1:
                # every hidden Linear is followed by LeakyReLU(0.2)
                # (Dropout between them is identity at inference)
                h = _leaky_relu(h, 0.2)             # f32 elementwise
                h = h.astype(jnp.bfloat16)          # back to bf16 for the next MXU pass
        # final layer is padded to a full 128-lane slab -> unmasked full-width store
        out_ref[...] = jax.nn.sigmoid(h).astype(out_ref.dtype)

    return kernel


def init_discriminator_params(key, input_size, output_size, hidden_size):
    """Deterministic init, PyTorch-Linear-style uniform(-1/sqrt(fan_in), 1/sqrt(fan_in))."""
    dims = [input_size] + list(hidden_size) + [output_size]
    params = []
    for i in range(len(dims) - 1):
        fan_in, fan_out = dims[i], dims[i + 1]
        key, kw, kb = jax.random.split(key, 3)
        bound = 1.0 / jnp.sqrt(jnp.float32(fan_in))
        w = jax.random.uniform(kw, (fan_in, fan_out), jnp.float32, -bound, bound)
        b = jax.random.uniform(kb, (1, fan_out), jnp.float32, -bound, bound)
        params.append((w, b))
    return params


def discriminator_forward(x, params, input_size, output_size, *, tm_max=1024):
    """x: any shape with total elements divisible by input_size (like torch .view(-1, input_size))."""
    x2d = x.reshape(-1, input_size)
    B = x2d.shape[0]
    n_layers = len(params)

    # Batch tile: multiple of 16 (bf16 sublane packing), as large as useful, capped at tm_max.
    tm = min(tm_max, _round_up(B, 16))
    b_pad = _round_up(B, tm)
    grid = (b_pad // tm,)

    # Lane-dense padded output width: final Linear weight/bias zero-padded to 128 lanes.
    out_pad = _round_up(output_size, _LANE)

    # Stream x as bf16 (halves HBM bytes for the dominant stream); pad batch rows with zeros.
    x_bf16 = jnp.zeros((b_pad, input_size), jnp.bfloat16).at[:B].set(x2d.astype(jnp.bfloat16))

    # Hoisted casts / padding: done once here, never inside the grid loop.
    flat = []
    in_specs = [pl.BlockSpec((tm, input_size), lambda i: (i, 0))]
    for li, (w, b) in enumerate(params):
        if li == n_layers - 1:
            w = jnp.zeros((w.shape[0], out_pad), w.dtype).at[:, :output_size].set(w)
            b = jnp.zeros((1, out_pad), b.dtype).at[:, :output_size].set(b)
        w_bf16 = w.astype(jnp.bfloat16)
        b_f32 = b.astype(jnp.float32)
        flat.extend([w_bf16, b_f32])
        in_specs.append(pl.BlockSpec(w_bf16.shape, lambda i: (0, 0)))  # resident
        in_specs.append(pl.BlockSpec(b_f32.shape, lambda i: (0, 0)))   # resident

    # Advisory cost estimate for XLA scheduling around the custom call.
    dims = [input_size] + [w.shape[1] for (w, _) in params]
    flops = 2 * b_pad * sum(dims[i] * dims[i + 1] for i in range(len(dims) - 1))
    bytes_accessed = (int(x_bf16.size) * 2
                      + sum(int(a.size) * a.dtype.itemsize for a in flat)
                      + b_pad * out_pad * 4)

    kernel = make_discriminator_kernel(n_layers)
    out = pl.pallas_call(
        kernel,
        out_shape=jax.ShapeDtypeStruct((b_pad, out_pad), jnp.float32),
        grid=grid,
        in_specs=in_specs,
        out_specs=pl.BlockSpec((tm, out_pad), lambda i: (i, 0)),
        compiler_params=pltpu.CompilerParams(
            dimension_semantics=("parallel",),          # shard batch axis across v7x's 2 TCs
            vmem_limit_bytes=48 * 1024 * 1024,          # budget below v7x's 64 MiB physical
        ),
        cost_estimate=pl.CostEstimate(
            flops=int(flops),
            transcendentals=int(b_pad * out_pad),
            bytes_accessed=int(bytes_accessed),
        ),
    )(x_bf16, *flat)
    return out[:B, :output_size]


def discriminator_reference(x, params, input_size):
    """Pure-JAX reference mirroring the kernel's bf16-stream / f32-accumulate numerics."""
    h = x.reshape(-1, input_size).astype(jnp.bfloat16)
    n_layers = len(params)
    for li, (w, b) in enumerate(params):
        h = jnp.dot(h, w.astype(jnp.bfloat16),
                    preferred_element_type=jnp.float32) + b.astype(jnp.float32)
        if li < n_layers - 1:
            h = _leaky_relu(h, 0.2).astype(jnp.bfloat16)
    return jax.nn.sigmoid(h)


if __name__ == "__main__":
    # Small shapes consistent with the module: Discriminator(input_size=16, output_size=1,
    # hidden_size=[32, 16]); input x is (2, 4, 16) which .view(-1, 16) flattens to (8, 16).
    input_size = 16
    output_size = 1
    hidden_size = [32, 16]

    key = jax.random.PRNGKey(0)
    key, kx = jax.random.split(key)
    x = jax.random.normal(kx, (2, 4, input_size), jnp.float32)

    params = init_discriminator_params(key, input_size, output_size, hidden_size)

    out = discriminator_forward(x, params, input_size, output_size)
    out = jax.block_until_ready(out)

    ref = discriminator_reference(x, params, input_size)
    assert out.shape == (8, output_size), out.shape
    assert jnp.allclose(out, ref, atol=1e-3, rtol=1e-3), "mismatch vs reference"

    print("KERNEL_OK")
</pallas_src>

<mosaic_0001>
module attributes {stable_mosaic.version = 11 : i64} {
  func.func @kernel(%arg0: i32, %arg1: memref<16x16xbf16, #tpu.memory_space<vmem>>, %arg2: memref<16x32xbf16, #tpu.memory_space<vmem>>, %arg3: memref<1x32xf32, #tpu.memory_space<vmem>>, %arg4: memref<32x16xbf16, #tpu.memory_space<vmem>>, %arg5: memref<1x16xf32, #tpu.memory_space<vmem>>, %arg6: memref<16x128xbf16, #tpu.memory_space<vmem>>, %arg7: memref<1x128xf32, #tpu.memory_space<vmem>>, %arg8: memref<16x128xf32, #tpu.memory_space<vmem>>) attributes {dimension_semantics = [#tpu.dimension_semantics<parallel>], iteration_bounds = array<i64: 1>, scalar_prefetch = 0 : i64, scratch_operands = 0 : i64, tpu.core_type = #tpu.core_type<tc>, window_params = [{transform_indices = @transform_0, window_bounds = array<i64: 16, 16>}, {pipeline_mode = #tpu.pipeline_mode<synchronous>, transform_indices = @transform_1, window_bounds = array<i64: 16, 32>}, {pipeline_mode = #tpu.pipeline_mode<synchronous>, transform_indices = @transform_2, window_bounds = array<i64: 1, 32>}, {pipeline_mode = #tpu.pipeline_mode<synchronous>, transform_indices = @transform_3, window_bounds = array<i64: 32, 16>}, {pipeline_mode = #tpu.pipeline_mode<synchronous>, transform_indices = @transform_4, window_bounds = array<i64: 1, 16>}, {pipeline_mode = #tpu.pipeline_mode<synchronous>, transform_indices = @transform_5, window_bounds = array<i64: 16, 128>}, {pipeline_mode = #tpu.pipeline_mode<synchronous>, transform_indices = @transform_6, window_bounds = array<i64: 1, 128>}, {transform_indices = @transform_7, window_bounds = array<i64: 16, 128>}]} {
    %c0 = arith.constant 0 : index
    %c0_0 = arith.constant 0 : index
    %0 = vector.load %arg1[%c0, %c0_0] : memref<16x16xbf16, #tpu.memory_space<vmem>>, vector<16x16xbf16>
    %c0_1 = arith.constant 0 : index
    %c0_2 = arith.constant 0 : index
    %1 = vector.load %arg2[%c0_1, %c0_2] : memref<16x32xbf16, #tpu.memory_space<vmem>>, vector<16x32xbf16>
    %c0_3 = arith.constant 0 : index
    %c0_4 = arith.constant 0 : index
    %2 = vector.load %arg3[%c0_3, %c0_4] : memref<1x32xf32, #tpu.memory_space<vmem>>, vector<1x32xf32>
    %cst = arith.constant dense<0.000000e+00> : vector<16x32xf32>
    %3 = tpu.matmul %0, %1, %cst {dimension_numbers = #tpu.dot_dimension_numbers<[1], [0], [0], [1], [0, 0, 1, 1], [], []>} : vector<16x16xbf16>, vector<16x32xbf16>, vector<16x32xf32> -> vector<16x32xf32>
    %4 = vector.broadcast %2 : vector<1x32xf32> to vector<16x32xf32>
    %5 = arith.addf %3, %4 : vector<16x32xf32>
    %cst_5 = arith.constant 0.000000e+00 : f32
    %6 = vector.broadcast %cst_5 : f32 to vector<16x32xf32>
    %7 = arith.cmpf ogt, %5, %6 : vector<16x32xf32>
    %cst_6 = arith.constant 2.000000e-01 : f32
    %8 = vector.broadcast %cst_6 : f32 to vector<16x32xf32>
    %9 = arith.mulf %8, %5 : vector<16x32xf32>
    %10 = arith.select %7, %5, %9 : vector<16x32xi1>, vector<16x32xf32>
    %11 = arith.truncf %10 : vector<16x32xf32> to vector<16x32xbf16>
    %c0_7 = arith.constant 0 : index
    %c0_8 = arith.constant 0 : index
    %12 = vector.load %arg4[%c0_7, %c0_8] : memref<32x16xbf16, #tpu.memory_space<vmem>>, vector<32x16xbf16>
    %c0_9 = arith.constant 0 : index
    %c0_10 = arith.constant 0 : index
    %13 = vector.load %arg5[%c0_9, %c0_10] : memref<1x16xf32, #tpu.memory_space<vmem>>, vector<1x16xf32>
    %cst_11 = arith.constant dense<0.000000e+00> : vector<16x16xf32>
    %14 = tpu.matmul %11, %12, %cst_11 {dimension_numbers = #tpu.dot_dimension_numbers<[1], [0], [0], [1], [0, 0, 1, 1], [], []>} : vector<16x32xbf16>, vector<32x16xbf16>, vector<16x16xf32> -> vector<16x16xf32>
    %15 = vector.broadcast %13 : vector<1x16xf32> to vector<16x16xf32>
    %16 = arith.addf %14, %15 : vector<16x16xf32>
    %cst_12 = arith.constant 0.000000e+00 : f32
    %17 = vector.broadcast %cst_12 : f32 to vector<16x16xf32>
    %18 = arith.cmpf ogt, %16, %17 : vector<16x16xf32>
    %cst_13 = arith.constant 2.000000e-01 : f32
    %19 = vector.broadcast %cst_13 : f32 to vector<16x16xf32>
    %20 = arith.mulf %19, %16 : vector<16x16xf32>
    %21 = arith.select %18, %16, %20 : vector<16x16xi1>, vector<16x16xf32>
    %22 = arith.truncf %21 : vector<16x16xf32> to vector<16x16xbf16>
    %c0_14 = arith.constant 0 : index
    %c0_15 = arith.constant 0 : index
    %23 = vector.load %arg6[%c0_14, %c0_15] : memref<16x128xbf16, #tpu.memory_space<vmem>>, vector<16x128xbf16>
    %c0_16 = arith.constant 0 : index
    %c0_17 = arith.constant 0 : index
    %24 = vector.load %arg7[%c0_16, %c0_17] : memref<1x128xf32, #tpu.memory_space<vmem>>, vector<1x128xf32>
    %cst_18 = arith.constant dense<0.000000e+00> : vector<16x128xf32>
    %25 = tpu.matmul %22, %23, %cst_18 {dimension_numbers = #tpu.dot_dimension_numbers<[1], [0], [0], [1], [0, 0, 1, 1], [], []>} : vector<16x16xbf16>, vector<16x128xbf16>, vector<16x128xf32> -> vector<16x128xf32>
    %26 = vector.broadcast %24 : vector<1x128xf32> to vector<16x128xf32>
    %27 = arith.addf %25, %26 : vector<16x128xf32>
    %28 = arith.negf %27 : vector<16x128xf32>
    %29 = math.exp %28 : vector<16x128xf32>
    %cst_19 = arith.constant 1.000000e+00 : f32
    %30 = vector.broadcast %cst_19 : f32 to vector<16x128xf32>
    %31 = arith.addf %30, %29 : vector<16x128xf32>
    %32 = arith.divf %30, %31 : vector<16x128xf32>
    %c0_20 = arith.constant 0 : index
    %c0_21 = arith.constant 0 : index
    %33 = vector.load %arg8[%c0_20, %c0_21] : memref<16x128xf32, #tpu.memory_space<vmem>>, vector<16x128xf32>
    tpu.vector_store %arg8[%c0_20, %c0_21], %32 {strides = array<i32>} : memref<16x128xf32, #tpu.memory_space<vmem>>, vector<16x128xf32>,
    return
  }
  func.func @transform_0(%arg0: i32) -> (i32, i32) {
    %c0_i32 = arith.constant 0 : i32
    %c0_i32_0 = arith.constant 0 : i32
    return %arg0, %c0_i32 : i32, i32
  }
  func.func @transform_1(%arg0: i32) -> (i32, i32) {
    %c0_i32 = arith.constant 0 : i32
    %c0_i32_0 = arith.constant 0 : i32
    %c0_i32_1 = arith.constant 0 : i32
    return %c0_i32, %c0_i32_0 : i32, i32
  }
  func.func @transform_2(%arg0: i32) -> (i32, i32) {
    %c0_i32 = arith.constant 0 : i32
    %c0_i32_0 = arith.constant 0 : i32
    %c0_i32_1 = arith.constant 0 : i32
    return %c0_i32, %c0_i32_0 : i32, i32
  }
  func.func @transform_3(%arg0: i32) -> (i32, i32) {
    %c0_i32 = arith.constant 0 : i32
    %c0_i32_0 = arith.constant 0 : i32
    %c0_i32_1 = arith.constant 0 : i32
    return %c0_i32, %c0_i32_0 : i32, i32
  }
  func.func @transform_4(%arg0: i32) -> (i32, i32) {
    %c0_i32 = arith.constant 0 : i32
    %c0_i32_0 = arith.constant 0 : i32
    %c0_i32_1 = arith.constant 0 : i32
    return %c0_i32, %c0_i32_0 : i32, i32
  }
  func.func @transform_5(%arg0: i32) -> (i32, i32) {
    %c0_i32 = arith.constant 0 : i32
    %c0_i32_0 = arith.constant 0 : i32
    %c0_i32_1 = arith.constant 0 : i32
    return %c0_i32, %c0_i32_0 : i32, i32
  }
  func.func @transform_6(%arg0: i32) -> (i32, i32) {
    %c0_i32 = arith.constant 0 : i32
    %c0_i32_0 = arith.constant 0 : i32
    %c0_i32_1 = arith.constant 0 : i32
    return %c0_i32, %c0_i32_0 : i32, i32
  }
  func.func @transform_7(%arg0: i32) -> (i32, i32) {
    %c0_i32 = arith.constant 0 : i32
    %c0_i32_0 = arith.constant 0 : i32
    return %arg0, %c0_i32 : i32, i32
  }
}

</mosaic_0001>

<llo_original>
// kernel: tpu_custom_call.1
$region0: #{tpu_custom_call.1}
  #allocation0 [shape = 'u32[]', space=smem, size = 0x4, offset = 0x4, fixed_abs, tag = 'smem constant byte address 0x4 - core index']
  #allocation1 [shape = 'u32[144,128]{1,0:T(1,128)}', space=vmem, size = 0x12000, scoped, tag = 'internal scratch']
  %s0 = inlined_call_operand.vmem [shape: bf16[16,16], index: 0, kind: input, shape index: {}]
  %s1 = inlined_call_operand.vmem [shape: bf16[16,32], index: 1, kind: input, shape index: {}]
  %s2 = inlined_call_operand.vmem [shape: f32[1,32], index: 2, kind: input, shape index: {}]
  %s3 = inlined_call_operand.vmem [shape: bf16[32,16], index: 3, kind: input, shape index: {}]
  %s4 = inlined_call_operand.vmem [shape: f32[1,16], index: 4, kind: input, shape index: {}]
  %s5 = inlined_call_operand.vmem [shape: bf16[16,128], index: 5, kind: input, shape index: {}]
  %s6 = inlined_call_operand.vmem [shape: f32[1,128], index: 6, kind: input, shape index: {}]
  %s7 = inlined_call_operand.hbm [shape: f32[16,128], index: 7, kind: output, shape index: {}]
  %s8 = sld [smem:[#allocation0]]
  $region38: #{tpu_custom_call.1} parent=0
    _
  %s10 = ssub.s32 1, %s8
  %s11 = scalar_select 0, %s10, %s8
  $region1: #{tpu_custom_call.1} parent=0
    #allocation2 [shape = 'u8[8192]{0}', space=vmem, size = 0x2000, scoped, tag = 'output window, operand 0, single buffered']
    #allocation3 [shape = 's32[1]{0}', space=sflag, size = 0x4, scoped, tag = 'scoped memory for tpu_custom_call.1']
    %12 = vsyncpa [#allocation3], 0
    // Predicated region
    $region2: #{tpu_custom_call.1} parent=1 // pred_check
      _
    $region3: #{tpu_custom_call.1} parent=1 // pred_check_branch
      %14 = sbr.rel (0) target = $region5
    $region4: #{tpu_custom_call.1} parent=1 // pred_region
      _
    $region5: #{tpu_custom_call.1} parent=1 // pred_fallthru
      _
    // Predicated region
    $region6: #{tpu_custom_call.1} parent=1 // pred_check
      _
    $region7: #{tpu_custom_call.1} parent=1 // pred_check_branch
      %16 = sbr.rel (0) target = $region9
    $region8: #{tpu_custom_call.1} parent=1 // pred_region
      _
    $region9: #{tpu_custom_call.1} parent=1 // pred_fallthru
      _
    // Predicated region
    $region10: #{tpu_custom_call.1} parent=1 // pred_check
      _
    $region11: #{tpu_custom_call.1} parent=1 // pred_check_branch
      %18 = sbr.rel (0) target = $region13
    $region12: #{tpu_custom_call.1} parent=1 // pred_region
      _
    $region13: #{tpu_custom_call.1} parent=1 // pred_fallthru
      _
    // Predicated region
    $region14: #{tpu_custom_call.1} parent=1 // pred_check
      _
    $region15: #{tpu_custom_call.1} parent=1 // pred_check_branch
      %20 = sbr.rel (0) target = $region17
    $region16: #{tpu_custom_call.1} parent=1 // pred_region
      _
    $region17: #{tpu_custom_call.1} parent=1 // pred_fallthru
      _
    // Predicated region
    $region18: #{tpu_custom_call.1} parent=1 // pred_check
      _
    $region19: #{tpu_custom_call.1} parent=1 // pred_check_branch
      %22 = sbr.rel (0) target = $region21
    $region20: #{tpu_custom_call.1} parent=1 // pred_region
      _
    $region21: #{tpu_custom_call.1} parent=1 // pred_fallthru
      _
    // Predicated region
    $region22: #{tpu_custom_call.1} parent=1 // pred_check
      _
    $region23: #{tpu_custom_call.1} parent=1 // pred_check_branch
      %24 = sbr.rel (0) target = $region25
    $region24: #{tpu_custom_call.1} parent=1 // pred_region
      _
    $region25: #{tpu_custom_call.1} parent=1 // pred_fallthru
      _
    // Predicated region
    $region26: #{tpu_custom_call.1} parent=1 // pred_check
      _
    $region27: #{tpu_custom_call.1} parent=1 // pred_check_branch
      %26 = sbr.rel (0) target = $region29
    $region28: #{tpu_custom_call.1} parent=1 // pred_region
      _
    $region29: #{tpu_custom_call.1} parent=1 // pred_fallthru
      _
    %v28 = vld [vmem:[%s0] sm:$0xf]
    %v29 = vld [vmem:[%s0 + $0x4] sm:$0xf]
    %v30 = vld [vmem:[%s1] sm:$0xf]
    %v31 = vld [vmem:[%s1 + $0x4] sm:$0xf]
    %v32 = vld [vmem:[%s2] sm:$0x1]
    %v34 = vlaneseq
    %v35 = vshrl.u32 %v34, 7
    %v36 = vsub.s32 0, %v35
    %v37 = vrot.slane %v32, %v36
    %v41 = vunpack.c.l.b16 %v28
    %v42 = vunpack.c.l.b16 %v29
    %v43 = vpack.c.b16 %v42, %v41
    %v46 = vunpack.c.l.b16 %v30
    %v47 = vunpack.c.l.b16 %v31
    %v48 = vpack.c.b16 %v47, %v46
    %vm50 = vcmask 130048
    %v52 = vsel %vm50, %v43, 0
    %54 = vmatprep.subr.bf16.mxu0 0
    %55 = vmatpush1.bf16.msra.mxu0 %v48
    %56 = vmatprep.subr.bf16.mxu0 0
    %57 = vmatpush1.bf16.msra.mxu0 0
    %58 = vmatprep.subr.bf16.mxu0 0
    %59 = vmatpush1.bf16.msra.mxu0 0
    %60 = vmatprep.subr.bf16.mxu0 0
    %61 = vmatpush1.bf16.msra.mxu0 0
    %62 = vmatprep.subr.bf16.mxu0 0
    %63 = vmatpush1.bf16.msra.mxu0 0
    %64 = vmatprep.subr.bf16.mxu0 0
    %65 = vmatpush1.bf16.msra.mxu0 0
    %66 = vmatprep.subr.bf16.mxu0 0
    %67 = vmatpush1.bf16.msra.mxu0 0
    %68 = vmatprep.subr.bf16.mxu0 0
    %69 = vmatpush1.bf16.msra.mxu0 0
    %70 = vmatprep.subr.bf16.mxu0 0
    %71 = vmatpush1.bf16.msra.mxu0 0
    %72 = vmatprep.subr.bf16.mxu0 0
    %73 = vmatpush1.bf16.msra.mxu0 0
    %74 = vmatprep.subr.bf16.mxu0 0
    %75 = vmatpush1.bf16.msra.mxu0 0
    %76 = vmatprep.subr.bf16.mxu0 0
    %77 = vmatpush1.bf16.msra.mxu0 0
    %78 = vmatprep.subr.bf16.mxu0 0
    %79 = vmatpush1.bf16.msra.mxu0 0
    %80 = vmatprep.subr.bf16.mxu0 0
    %81 = vmatpush1.bf16.msra.mxu0 0
    %82 = vmatprep.subr.bf16.mxu0 0
    %83 = vmatpush1.bf16.msra.mxu0 0
    %84 = vmatprep.subr.bf16.mxu0 0
    %85 = vmatpush1.bf16.msra.mxu0 0
    %86 = vmatprep.mubr.bf16.mxu0 0
    %87 = vmatmul.mubr.bf16.gmra.mrb[0].mxu0 %v52
    %v88 = vpop.f32.mrb[0].mxu0
    %v89 = vadd.f32 %v37, %v88
    %v90 = vpop.f32.mrb[0].mxu0
    %v91 = vpop.f32.mrb[0].mxu0
    %v92 = vadd.f32 %v37, %v91
    %v93 = vpop.f32.mrb[0].mxu0
    %94 = vdwg.mxu0
    %vm95 = vcmp.gt.f32.partialorder %v89, 0.0
    %vm96 = vcmp.gt.f32.partialorder %v92, 0.0
    %v97 = vmul.f32 %v89, 0.2
    %v98 = vmul.f32 %v92, 0.2
    %v99 = vsel %vm95, %v89, %v97
    %v100 = vsel %vm96, %v92, %v98
    %v101 = vpack.c.bf16 %v100, %v99
    %v102 = vld [vmem:[%s3] sm:$0xf]
    %v103 = vld [vmem:[%s3 + $0x4] sm:$0xf]
    %v104 = vld [vmem:[%s3 + $0x8] sm:$0xf]
    %v105 = vld [vmem:[%s3 + $0xc] sm:$0xf]
    %v106 = vld [vmem:[%s4] sm:$0x1]
    %v108 = vlaneseq
    %v109 = vshrl.u32 %v108, 7
    %v110 = vsub.s32 0, %v109
    %v111 = vrot.slane %v106, %v110
    %v117 = vunpack.c.l.b16 %v102
    %v118 = vunpack.c.l.b16 %v103
    %v119 = vunpack.c.l.b16 %v104
    %v120 = vunpack.c.l.b16 %v105
    %v121 = vpack.c.b16 %v118, %v117
    %v122 = vpack.c.b16 %v120, %v119
    %vm125 = vcmask 261120
    %v127 = vsel %vm125, %v101, 0
    %129 = vmatprep.subr.bf16.mxu0 0
    %130 = vmatpush1.bf16.msra.mxu0 %v121
    %131 = vmatprep.subr.bf16.mxu0 0
    %132 = vmatpush1.bf16.msra.mxu0 %v122
    %133 = vmatprep.subr.bf16.mxu0 0
    %134 = vmatpush1.bf16.msra.mxu0 0
    %135 = vmatprep.subr.bf16.mxu0 0
    %136 = vmatpush1.bf16.msra.mxu0 0
    %137 = vmatprep.subr.bf16.mxu0 0
    %138 = vmatpush1.bf16.msra.mxu0 0
    %139 = vmatprep.subr.bf16.mxu0 0
    %140 = vmatpush1.bf16.msra.mxu0 0
    %141 = vmatprep.subr.bf16.mxu0 0
    %142 = vmatpush1.bf16.msra.mxu0 0
    %143 = vmatprep.subr.bf16.mxu0 0
    %144 = vmatpush1.bf16.msra.mxu0 0
    %145 = vmatprep.subr.bf16.mxu0 0
    %146 = vmatpush1.bf16.msra.mxu0 0
    %147 = vmatprep.subr.bf16.mxu0 0
    %148 = vmatpush1.bf16.msra.mxu0 0
    %149 = vmatprep.subr.bf16.mxu0 0
    %150 = vmatpush1.bf16.msra.mxu0 0
    %151 = vmatprep.subr.bf16.mxu0 0
    %152 = vmatpush1.bf16.msra.mxu0 0
    %153 = vmatprep.subr.bf16.mxu0 0
    %154 = vmatpush1.bf16.msra.mxu0 0
    %155 = vmatprep.subr.bf16.mxu0 0
    %156 = vmatpush1.bf16.msra.mxu0 0
    %157 = vmatprep.subr.bf16.mxu0 0
    %158 = vmatpush1.bf16.msra.mxu0 0
    %159 = vmatprep.subr.bf16.mxu0 0
    %160 = vmatpush1.bf16.msra.mxu0 0
    %161 = vmatprep.mubr.bf16.mxu0 0
    %162 = vmatmul.mubr.bf16.gmra.mrb[0].mxu0 %v127
    %v163 = vpop.f32.mrb[0].mxu0
    %v164 = vadd.f32 %v111, %v163
    %v165 = vpop.f32.mrb[0].mxu0
    %v166 = vpop.f32.mrb[0].mxu0
    %v167 = vadd.f32 %v111, %v166
    %v168 = vpop.f32.mrb[0].mxu0
    %169 = vdwg.mxu0
    %vm170 = vcmp.gt.f32.partialorder %v164, 0.0
    %vm171 = vcmp.gt.f32.partialorder %v167, 0.0
    %v172 = vmul.f32 %v164, 0.2
    %v173 = vmul.f32 %v167, 0.2
    %v174 = vsel %vm170, %v164, %v172
    %v175 = vsel %vm171, %v167, %v173
    %v176 = vpack.c.bf16 %v175, %v174
    %v177 = vld [vmem:[%s5] sm:$0xf]
    %v178 = vld [vmem:[%s5 + $0x4] sm:$0xf]
    %v179 = vld [vmem:[%s6] sm:$0x1]
    %v181 = vlaneseq
    %v182 = vshrl.u32 %v181, 7
    %v183 = vsub.s32 0, %v182
    %v184 = vrot.slane %v179, %v183
    %v188 = vunpack.c.l.b16 %v177
    %v189 = vunpack.c.l.b16 %v178
    %v190 = vpack.c.b16 %v189, %v188
    %v193 = vsel %vm50, %v176, 0
    %195 = vmatprep.subr.bf16.mxu0 0
    %196 = vmatpush1.bf16.msra.mxu0 %v190
    %197 = vmatprep.subr.bf16.mxu0 0
    %198 = vmatpush1.bf16.msra.mxu0 0
    %199 = vmatprep.subr.bf16.mxu0 0
    %200 = vmatpush1.bf16.msra.mxu0 0
    %201 = vmatprep.subr.bf16.mxu0 0
    %202 = vmatpush1.bf16.msra.mxu0 0
    %203 = vmatprep.subr.bf16.mxu0 0
    %204 = vmatpush1.bf16.msra.mxu0 0
    %205 = vmatprep.subr.bf16.mxu0 0
    %206 = vmatpush1.bf16.msra.mxu0 0
    %207 = vmatprep.subr.bf16.mxu0 0
    %208 = vmatpush1.bf16.msra.mxu0 0
    %209 = vmatprep.subr.bf16.mxu0 0
    %210 = vmatpush1.bf16.msra.mxu0 0
    %211 = vmatprep.subr.bf16.mxu0 0
    %212 = vmatpush1.bf16.msra.mxu0 0
    %213 = vmatprep.subr.bf16.mxu0 0
    %214 = vmatpush1.bf16.msra.mxu0 0
    %215 = vmatprep.subr.bf16.mxu0 0
    %216 = vmatpush1.bf16.msra.mxu0 0
    %217 = vmatprep.subr.bf16.mxu0 0
    %218 = vmatpush1.bf16.msra.mxu0 0
    %219 = vmatprep.subr.bf16.mxu0 0
    %220 = vmatpush1.bf16.msra.mxu0 0
    %221 = vmatprep.subr.bf16.mxu0 0
    %222 = vmatpush1.bf16.msra.mxu0 0
    %223 = vmatprep.subr.bf16.mxu0 0
    %224 = vmatpush1.bf16.msra.mxu0 0
    %225 = vmatprep.subr.bf16.mxu0 0
    %226 = vmatpush1.bf16.msra.mxu0 0
    %227 = vmatprep.mubr.bf16.mxu0 0
    %228 = vmatmul.mubr.bf16.gmra.mrb[0].mxu0 %v193
    %v229 = vpop.f32.mrb[0].mxu0
    %v230 = vadd.f32 %v184, %v229
    %v231 = vpop.f32.mrb[0].mxu0
    %v232 = vpop.f32.mrb[0].mxu0
    %v233 = vadd.f32 %v184, %v232
    %v234 = vpop.f32.mrb[0].mxu0
    %235 = vdwg.mxu0
    %v236 = vxor.u32 %v230, 2147483648
    %v237 = vxor.u32 %v233, 2147483648
    %v238 = vmul.f32 %v236, 1.442695
    %v239 = vpow.pop %v238
    %v240 = vmul.f32 %v237, 1.442695
    %v241 = vpow.pop %v240
    %v242 = vadd.f32 %v239, 1.0
    %v243 = vadd.f32 %v241, 1.0
    %v244 = vrcp.pop %v242
    %v245 = vmul.f32 1.0, %v244
    %v246 = vrcp.pop %v243
    %v247 = vmul.f32 1.0, %v246
    %248 = vst [vmem:[#allocation2] sm:$0xff] %v245
    %249 = vst [vmem:[#allocation2 + $0x8] sm:$0xff] %v247
    // Predicated region
    $region30: #{tpu_custom_call.1} parent=1 // pred_check
      _
    $region31: #{tpu_custom_call.1} parent=1 // pred_check_branch
      %251 = sbr.rel (0) target = $region33
    $region32: #{tpu_custom_call.1} parent=1 // pred_region
      %s253 = ssub.s32 256, 256
      %254 = vsyncadd [#allocation3], %s253
      %s255 = sshll.u32 [#allocation2], 4
      %s256 = int_to_ptr.vmem [resolvable:$true] %s255
      %261 = dma.vmem_to_hbm [thread:$0]  %s256, 256, %s7, [#allocation3], 128, 128, 8
    $region33: #{tpu_custom_call.1} parent=1 // pred_fallthru
      _
    // Predicated region
    $region34: #{tpu_custom_call.1} parent=1 // pred_check
      _
    $region35: #{tpu_custom_call.1} parent=1 // pred_check_branch
      %263 = sbr.rel (0) target = $region37
    $region36: #{tpu_custom_call.1} parent=1 // pred_region
      %264 = dma.done [#allocation3], 256
    $region37: #{tpu_custom_call.1} parent=1 // pred_fallthru
      _
    %265 = vsyncpa [#allocation3], 1

</llo_original>
